<compile_context>
chip_gen: v7x
topology: tpu7x:2x2x1
jax: 0.10.0
libtpu: 0.0.40
codegen_flags: <defaults>
</compile_context>

<pallas_src>
import functools

import jax
import jax.numpy as jnp
from jax.experimental import pallas as pl
from jax.experimental.pallas import tpu as pltpu


def _round_up(x, m):
    return ((x + m - 1) // m) * m


def _cdiv(a, b):
    return -(-a // b)


def _critic_kernel(sga_ref, w1_ref, b1_ref, w2_ref, b2_ref, w3_ref, b3_ref,
                   out_ref):
    sga = sga_ref[...]                                    # (TB, IN1_PAD) bf16

    # fc1 over cat([s, g - s, a]); g-s folded into W1 at init.  The padding
    # columns h1..h1+2*act_dim carry the +/-a identity passthrough.
    h1 = (jnp.dot(sga, w1_ref[...], preferred_element_type=jnp.float32)
          + b1_ref[...])
    x1 = jnp.maximum(h1, 0.0).astype(jnp.bfloat16)        # (TB, H1_PAD)

    # fc2 over cat([x1, a]): the action rows of W2 were moved onto the
    # +/-a passthrough rows of the padded W2, so a single dot suffices.
    h2 = (jnp.dot(x1, w2_ref[...], preferred_element_type=jnp.float32)
          + b2_ref[...])
    x2 = jnp.maximum(h2, 0.0)                             # (TB, H2_PAD) f32

    # fc3: single output column -> VPU multiply + cross-lane reduce (no MXU).
    q = jnp.sum(x2 * w3_ref[...], axis=-1, keepdims=True) + b3_ref[0, 0]
    out_ref[...] = q


@functools.partial(jax.jit, static_argnames=())
def _critic_forward_impl(s, g, a, kparams):
    B = s.shape[0]
    in1 = s.shape[1] * 2 + a.shape[1]

    IN1_PAD, H1_PAD = kparams["w1"].shape
    H2_PAD = kparams["w2"].shape[1]

    # Balanced batch tiles: cap per-tile rows at 1024, round TB to 16
    # (bf16 (16,128) sublane tile), keep padding waste below one sublane group.
    # B > 1024 => >= 2 grid tiles, so v7x's two TensorCores both get work.
    TB_CAP = 1024
    num_tiles = _cdiv(B, TB_CAP)
    TB = _round_up(_cdiv(B, num_tiles), 16)
    B_pad = num_tiles * TB

    # Stage cat([s, g, a]) into the padded bf16 slab in one fused write.
    sga = jnp.zeros((B_pad, IN1_PAD), jnp.bfloat16)
    sga = sga.at[:B, :in1].set(
        jnp.concatenate([s, g, a], axis=-1).astype(jnp.bfloat16))

    out = pl.pallas_call(
        _critic_kernel,
        out_shape=jax.ShapeDtypeStruct((B_pad, 1), jnp.float32),
        grid=(num_tiles,),
        in_specs=[
            # batch-tiled activations
            pl.BlockSpec((TB, IN1_PAD), lambda i: (i, 0)),
            # weights/biases: full-array blocks, constant index -> VMEM-resident
            pl.BlockSpec((IN1_PAD, H1_PAD), lambda i: (0, 0)),
            pl.BlockSpec((1, H1_PAD), lambda i: (0, 0)),
            pl.BlockSpec((H1_PAD, H2_PAD), lambda i: (0, 0)),
            pl.BlockSpec((1, H2_PAD), lambda i: (0, 0)),
            pl.BlockSpec((1, H2_PAD), lambda i: (0, 0)),
            # scalar fc3 bias in SMEM
            pl.BlockSpec(memory_space=pltpu.MemorySpace.SMEM),
        ],
        out_specs=pl.BlockSpec((TB, 1), lambda i: (i, 0)),
        compiler_params=pltpu.CompilerParams(
            dimension_semantics=("parallel",),
            vmem_limit_bytes=32 * 1024 * 1024),
    )(sga, kparams["w1"], kparams["b1"], kparams["w2"], kparams["b2"],
      kparams["w3"], kparams["b3"])
    return out[:B]


def ddpg_critic_forward(s, g, a, kparams):
    """Fused critic forward. s, g: (B, obs_dim); a: (B, act_dim) -> (B, 1) f32."""
    if s.shape[0] == 0:
        return jnp.zeros((0, 1), jnp.float32)
    return _critic_forward_impl(s, g, a, kparams)


def init_params(key, obs_dim, act_dim, hidden_dims=(400, 300)):
    """Deterministic synthetic init mirroring nn.Linear (U(+-1/sqrt(fan_in)))."""
    h1, h2 = hidden_dims
    in1 = obs_dim * 2 + act_dim
    in2 = h1 + act_dim
    ks = jax.random.split(key, 6)

    def lin(k, fan_in, shape):
        bound = 1.0 / (fan_in ** 0.5)
        return jax.random.uniform(k, shape, jnp.float32, -bound, bound)

    return {
        "w1": lin(ks[0], in1, (in1, h1)),   # (obs*2+act, h1), x @ W layout
        "b1": lin(ks[1], in1, (h1,)),
        "w2": lin(ks[2], in2, (in2, h2)),   # (h1+act, h2)
        "b2": lin(ks[3], in2, (h2,)),
        "w3": lin(ks[4], h2, (h2, 1)),
        "b3": lin(ks[5], h2, (1,)),
    }


def prepare_kernel_params(raw, obs_dim, act_dim, hidden_dims=(400, 300)):
    """Fold g-s into fc1, route a through fc1's padding as +/-identity so fc2's
    action slice rides the single x1 @ W2 dot; zero-pad to 128-multiples; bf16."""
    h1, h2 = hidden_dims
    in1 = obs_dim * 2 + act_dim
    IN1_PAD = _round_up(in1, 128)
    H1_PAD = _round_up(h1 + 2 * act_dim, 128)   # room for the +/-a passthrough
    H2_PAD = _round_up(h2, 128)

    w1 = raw["w1"]
    w1s, w1g, w1a = w1[:obs_dim], w1[obs_dim:2 * obs_dim], w1[2 * obs_dim:]
    # cat([s, g-s, a]) @ W1 == cat([s, g, a]) @ [W1s - W1g; W1g; W1a]
    w1_folded = jnp.concatenate([w1s - w1g, w1g, w1a], axis=0)
    w1_pad = jnp.zeros((IN1_PAD, H1_PAD), jnp.float32).at[:in1, :h1].set(w1_folded)
    # +/-identity passthrough on the action rows (zero bias in those columns):
    # relu(+a) - relu(-a) == a, reconstructed inside fc2's weights below.
    eye = jnp.eye(act_dim, dtype=jnp.float32)
    w1_pad = w1_pad.at[2 * obs_dim:in1, h1:h1 + act_dim].set(eye)
    w1_pad = w1_pad.at[2 * obs_dim:in1, h1 + act_dim:h1 + 2 * act_dim].set(-eye)
    b1_pad = jnp.zeros((1, H1_PAD), jnp.float32).at[0, :h1].set(raw["b1"])

    w2 = raw["w2"]
    w2x, w2a = w2[:h1], w2[h1:]
    w2_pad = jnp.zeros((H1_PAD, H2_PAD), jnp.float32).at[:h1, :h2].set(w2x)
    w2_pad = w2_pad.at[h1:h1 + act_dim, :h2].set(w2a)               # +W2a
    w2_pad = w2_pad.at[h1 + act_dim:h1 + 2 * act_dim, :h2].set(-w2a)  # -W2a
    b2_pad = jnp.zeros((1, H2_PAD), jnp.float32).at[0, :h2].set(raw["b2"])

    w3_row = jnp.zeros((1, H2_PAD), jnp.float32).at[0, :h2].set(raw["w3"][:, 0])
    b3 = raw["b3"].reshape(1, 1).astype(jnp.float32)

    return {
        "w1": w1_pad.astype(jnp.bfloat16),
        "b1": b1_pad,                       # f32
        "w2": w2_pad.astype(jnp.bfloat16),
        "b2": b2_pad,                       # f32
        "w3": w3_row,                       # f32 (VPU path)
        "b3": b3,                           # f32 scalar (SMEM)
    }


def _reference_f32(s, g, a, raw):
    """Pure-JAX f32 reference matching the original PyTorch forward."""
    sg = jnp.concatenate([s, g - s, a], axis=-1)
    x = jax.nn.relu(sg @ raw["w1"] + raw["b1"])
    xa = jnp.concatenate([x, a], axis=-1)
    x = jax.nn.relu(xa @ raw["w2"] + raw["b2"])
    return x @ raw["w3"] + raw["b3"]


def _reference_kernel_math(s, g, a, kparams):
    """Emulates the kernel's bf16 math in plain JAX for a tight correctness check."""
    in1 = s.shape[1] * 2 + a.shape[1]
    IN1_PAD = kparams["w1"].shape[0]
    sga = jnp.concatenate([s, g, a], axis=-1).astype(jnp.bfloat16)
    sga = jnp.pad(sga, ((0, 0), (0, IN1_PAD - in1))).astype(jnp.float32)
    h1 = sga @ kparams["w1"].astype(jnp.float32) + kparams["b1"]
    x1 = jnp.maximum(h1, 0.0).astype(jnp.bfloat16).astype(jnp.float32)
    h2 = x1 @ kparams["w2"].astype(jnp.float32) + kparams["b2"]
    x2 = jnp.maximum(h2, 0.0)
    return jnp.sum(x2 * kparams["w3"], axis=-1, keepdims=True) + kparams["b3"][0, 0]


if __name__ == "__main__":
    obs_dim, act_dim = 16, 8
    hidden_dims = (400, 300)
    batch = 2

    key = jax.random.PRNGKey(0)
    kp_key, ks, kg, ka = jax.random.split(key, 4)

    raw = init_params(kp_key, obs_dim, act_dim, hidden_dims)
    kparams = prepare_kernel_params(raw, obs_dim, act_dim, hidden_dims)

    s = jax.random.normal(ks, (batch, obs_dim), jnp.float32)
    g = jax.random.normal(kg, (batch, obs_dim), jnp.float32)
    a = jax.random.normal(ka, (batch, act_dim), jnp.float32)

    out = jax.block_until_ready(ddpg_critic_forward(s, g, a, kparams))
    ref_f32 = _reference_f32(s, g, a, raw)
    ref_bf16 = _reference_kernel_math(s, g, a, kparams)

    assert out.shape == (batch, 1)
    # Tight check vs. a reference that replicates the kernel's bf16 math.
    assert jnp.allclose(out, ref_bf16, atol=2e-3, rtol=2e-3), (out, ref_bf16)
    # Looser check vs. the original f32 forward (bf16 weights/activations).
    assert jnp.allclose(out, ref_f32, atol=7.5e-2, rtol=5e-2), (out, ref_f32)

    print("KERNEL_OK")
</pallas_src>

<mosaic_0001>
module attributes {stable_mosaic.version = 11 : i64} {
  func.func @_critic_kernel(%arg0: i32, %arg1: memref<16x128xbf16, #tpu.memory_space<vmem>>, %arg2: memref<128x512xbf16, #tpu.memory_space<vmem>>, %arg3: memref<1x512xf32, #tpu.memory_space<vmem>>, %arg4: memref<512x384xbf16, #tpu.memory_space<vmem>>, %arg5: memref<1x384xf32, #tpu.memory_space<vmem>>, %arg6: memref<1x384xf32, #tpu.memory_space<vmem>>, %arg7: memref<1x1xf32, #tpu.memory_space<smem>>, %arg8: memref<16x1xf32, #tpu.memory_space<vmem>>) attributes {dimension_semantics = [#tpu.dimension_semantics<parallel>], iteration_bounds = array<i64: 1>, scalar_prefetch = 0 : i64, scratch_operands = 0 : i64, tpu.core_type = #tpu.core_type<tc>, window_params = [{transform_indices = @transform_0, window_bounds = array<i64: 16, 128>}, {pipeline_mode = #tpu.pipeline_mode<synchronous>, transform_indices = @transform_1, window_bounds = array<i64: 128, 512>}, {pipeline_mode = #tpu.pipeline_mode<synchronous>, transform_indices = @transform_2, window_bounds = array<i64: 1, 512>}, {pipeline_mode = #tpu.pipeline_mode<synchronous>, transform_indices = @transform_3, window_bounds = array<i64: 512, 384>}, {pipeline_mode = #tpu.pipeline_mode<synchronous>, transform_indices = @transform_4, window_bounds = array<i64: 1, 384>}, {pipeline_mode = #tpu.pipeline_mode<synchronous>, transform_indices = @transform_5, window_bounds = array<i64: 1, 384>}, {transform_indices = @transform_6, window_bounds = array<i64: 1, 1>}, {transform_indices = @transform_7, window_bounds = array<i64: 16, 1>}]} {
    %c0 = arith.constant 0 : index
    %c0_0 = arith.constant 0 : index
    %0 = vector.load %arg1[%c0, %c0_0] : memref<16x128xbf16, #tpu.memory_space<vmem>>, vector<16x128xbf16>
    %c0_1 = arith.constant 0 : index
    %c0_2 = arith.constant 0 : index
    %1 = vector.load %arg2[%c0_1, %c0_2] : memref<128x512xbf16, #tpu.memory_space<vmem>>, vector<128x512xbf16>
    %cst = arith.constant dense<0.000000e+00> : vector<16x512xf32>
    %2 = tpu.matmul %0, %1, %cst {dimension_numbers = #tpu.dot_dimension_numbers<[1], [0], [0], [1], [0, 0, 1, 1], [], []>} : vector<16x128xbf16>, vector<128x512xbf16>, vector<16x512xf32> -> vector<16x512xf32>
    %c0_3 = arith.constant 0 : index
    %c0_4 = arith.constant 0 : index
    %3 = vector.load %arg3[%c0_3, %c0_4] : memref<1x512xf32, #tpu.memory_space<vmem>>, vector<1x512xf32>
    %4 = vector.broadcast %3 : vector<1x512xf32> to vector<16x512xf32>
    %5 = arith.addf %2, %4 : vector<16x512xf32>
    %cst_5 = arith.constant 0.000000e+00 : f32
    %6 = vector.broadcast %cst_5 : f32 to vector<16x512xf32>
    %7 = arith.maximumf %5, %6 : vector<16x512xf32>
    %8 = arith.truncf %7 : vector<16x512xf32> to vector<16x512xbf16>
    %c0_6 = arith.constant 0 : index
    %c0_7 = arith.constant 0 : index
    %9 = vector.load %arg4[%c0_6, %c0_7] : memref<512x384xbf16, #tpu.memory_space<vmem>>, vector<512x384xbf16>
    %cst_8 = arith.constant dense<0.000000e+00> : vector<16x384xf32>
    %10 = tpu.matmul %8, %9, %cst_8 {dimension_numbers = #tpu.dot_dimension_numbers<[1], [0], [0], [1], [0, 0, 1, 1], [], []>} : vector<16x512xbf16>, vector<512x384xbf16>, vector<16x384xf32> -> vector<16x384xf32>
    %c0_9 = arith.constant 0 : index
    %c0_10 = arith.constant 0 : index
    %11 = vector.load %arg5[%c0_9, %c0_10] : memref<1x384xf32, #tpu.memory_space<vmem>>, vector<1x384xf32>
    %12 = vector.broadcast %11 : vector<1x384xf32> to vector<16x384xf32>
    %13 = arith.addf %10, %12 : vector<16x384xf32>
    %cst_11 = arith.constant 0.000000e+00 : f32
    %14 = vector.broadcast %cst_11 : f32 to vector<16x384xf32>
    %15 = arith.maximumf %13, %14 : vector<16x384xf32>
    %c0_12 = arith.constant 0 : index
    %c0_13 = arith.constant 0 : index
    %16 = vector.load %arg6[%c0_12, %c0_13] : memref<1x384xf32, #tpu.memory_space<vmem>>, vector<1x384xf32>
    %17 = vector.broadcast %16 : vector<1x384xf32> to vector<16x384xf32>
    %18 = arith.mulf %15, %17 : vector<16x384xf32>
    %cst_14 = arith.constant dense<0.000000e+00> : vector<16xf32>
    %19 = vector.multi_reduction <add>, %18, %cst_14 [1] : vector<16x384xf32> to vector<16xf32>
    %20 = vector.shape_cast %19 : vector<16xf32> to vector<16x1xf32>
    %c0_15 = arith.constant 0 : index
    %c0_16 = arith.constant 0 : index
    %21 = memref.load %arg7[%c0_15, %c0_16] : memref<1x1xf32, #tpu.memory_space<smem>>
    %22 = vector.broadcast %21 : f32 to vector<16x1xf32>
    %23 = arith.addf %20, %22 : vector<16x1xf32>
    %c0_17 = arith.constant 0 : index
    %c0_18 = arith.constant 0 : index
    %24 = vector.load %arg8[%c0_17, %c0_18] : memref<16x1xf32, #tpu.memory_space<vmem>>, vector<16x1xf32>
    tpu.vector_store %arg8[%c0_17, %c0_18], %23 {strides = array<i32>} : memref<16x1xf32, #tpu.memory_space<vmem>>, vector<16x1xf32>,
    return
  }
  func.func @transform_0(%arg0: i32) -> (i32, i32) {
    %c0_i32 = arith.constant 0 : i32
    %c0_i32_0 = arith.constant 0 : i32
    return %arg0, %c0_i32 : i32, i32
  }
  func.func @transform_1(%arg0: i32) -> (i32, i32) {
    %c0_i32 = arith.constant 0 : i32
    %c0_i32_0 = arith.constant 0 : i32
    %c0_i32_1 = arith.constant 0 : i32
    return %c0_i32, %c0_i32_0 : i32, i32
  }
  func.func @transform_2(%arg0: i32) -> (i32, i32) {
    %c0_i32 = arith.constant 0 : i32
    %c0_i32_0 = arith.constant 0 : i32
    %c0_i32_1 = arith.constant 0 : i32
    return %c0_i32, %c0_i32_0 : i32, i32
  }
  func.func @transform_3(%arg0: i32) -> (i32, i32) {
    %c0_i32 = arith.constant 0 : i32
    %c0_i32_0 = arith.constant 0 : i32
    %c0_i32_1 = arith.constant 0 : i32
    return %c0_i32, %c0_i32_0 : i32, i32
  }
  func.func @transform_4(%arg0: i32) -> (i32, i32) {
    %c0_i32 = arith.constant 0 : i32
    %c0_i32_0 = arith.constant 0 : i32
    %c0_i32_1 = arith.constant 0 : i32
    return %c0_i32, %c0_i32_0 : i32, i32
  }
  func.func @transform_5(%arg0: i32) -> (i32, i32) {
    %c0_i32 = arith.constant 0 : i32
    %c0_i32_0 = arith.constant 0 : i32
    %c0_i32_1 = arith.constant 0 : i32
    return %c0_i32, %c0_i32_0 : i32, i32
  }
  func.func @transform_6(%arg0: i32) -> (i32, i32) {
    %c0_i32 = arith.constant 0 : i32
    %c0_i32_0 = arith.constant 0 : i32
    %c0_i32_1 = arith.constant 0 : i32
    return %c0_i32, %c0_i32_0 : i32, i32
  }
  func.func @transform_7(%arg0: i32) -> (i32, i32) {
    %c0_i32 = arith.constant 0 : i32
    %c0_i32_0 = arith.constant 0 : i32
    return %arg0, %c0_i32 : i32, i32
  }
}

</mosaic_0001>

<llo_original>
// kernel: _critic_forward_impl.1
$region0: #{_critic_forward_impl.1}
  #allocation0 [shape = 'u32[]', space=smem, size = 0x4, offset = 0x4, fixed_abs, tag = 'smem constant byte address 0x4 - core index']
  #allocation1 [shape = 'u32[144,128]{1,0:T(1,128)}', space=vmem, size = 0x12000, scoped, tag = 'internal scratch']
  #allocation2 [shape = 'f32[1,1]{1,0:T(1,128)S(6)}', space=smem, size = 0x200, scoped, tag = 'scoped memory for _critic_forward_impl.1']
  %s0 = inlined_call_operand.vmem [shape: bf16[16,128], index: 0, kind: input, shape index: {}]
  %s1 = inlined_call_operand.hbm [shape: bf16[128,512], index: 1, kind: input, shape index: {}]
  %s2 = inlined_call_operand.vmem [shape: f32[1,512], index: 2, kind: input, shape index: {}]
  %s3 = inlined_call_operand.hbm [shape: bf16[512,384], index: 3, kind: input, shape index: {}]
  %s4 = inlined_call_operand.vmem [shape: f32[1,384], index: 4, kind: input, shape index: {}]
  %s5 = inlined_call_operand.vmem [shape: f32[1,384], index: 5, kind: input, shape index: {}]
  %s6 = inlined_call_operand.<no memory space> [shape: f32[1,1], index: 6, kind: input, shape index: {}]
  %s7 = inlined_call_operand.vmem [shape: f32[16,1], index: 7, kind: output, shape index: {}]
  %s8 = sld [smem:[#allocation0]]
  $region46: #{_critic_forward_impl.1} parent=0
    _
  %s10 = ssub.s32 1, %s8
  %s11 = scalar_select 0, %s10, %s8
  %12 = sst [smem:[#allocation2]] %s6
  $region1: #{_critic_forward_impl.1} parent=0
    #allocation3 [shape = 'u8[131072]{0}', space=vmem, size = 0x20000, scoped, tag = 'input window, operand 1, single buffered']
    #allocation4 [shape = 's32[1]{0}', space=sflag, size = 0x4, scoped, tag = 'scoped memory for _critic_forward_impl.1']
    #allocation5 [shape = 'u8[393216]{0}', space=vmem, size = 0x60000, scoped, tag = 'input window, operand 3, single buffered']
    #allocation6 [shape = 's32[1]{0}', space=sflag, size = 0x4, scoped, tag = 'scoped memory for _critic_forward_impl.1']
    %13 = vsyncpa [#allocation4], 0
    %14 = vsyncpa [#allocation6], 0
    // Predicated region
    $region2: #{_critic_forward_impl.1} parent=1 // pred_check
      _
    $region3: #{_critic_forward_impl.1} parent=1 // pred_check_branch
      %16 = sbr.rel (0) target = $region5
    $region4: #{_critic_forward_impl.1} parent=1 // pred_region
      _
    $region5: #{_critic_forward_impl.1} parent=1 // pred_fallthru
      _
    // Predicated region
    $region6: #{_critic_forward_impl.1} parent=1 // pred_check
      _
    $region7: #{_critic_forward_impl.1} parent=1 // pred_check_branch
      %18 = sbr.rel (0) target = $region9
    $region8: #{_critic_forward_impl.1} parent=1 // pred_region
      %s20 = ssub.s32 4096, 4096
      %21 = vsyncadd [#allocation4], %s20
      %s22 = sshll.u32 [#allocation3], 4
      %s23 = int_to_ptr.vmem [resolvable:$true] %s22
      %28 = dma.hbm_to_vmem [thread:$0]  %s1, 4096, %s23, [#allocation4], 256, 256, 16
    $region9: #{_critic_forward_impl.1} parent=1 // pred_fallthru
      _
    // Predicated region
    $region10: #{_critic_forward_impl.1} parent=1 // pred_check
      _
    $region11: #{_critic_forward_impl.1} parent=1 // pred_check_branch
      %30 = sbr.rel (0) target = $region13
    $region12: #{_critic_forward_impl.1} parent=1 // pred_region
      _
    $region13: #{_critic_forward_impl.1} parent=1 // pred_fallthru
      _
    // Predicated region
    $region14: #{_critic_forward_impl.1} parent=1 // pred_check
      _
    $region15: #{_critic_forward_impl.1} parent=1 // pred_check_branch
      %32 = sbr.rel (0) target = $region17
    $region16: #{_critic_forward_impl.1} parent=1 // pred_region
      %s34 = ssub.s32 12288, 12288
      %35 = vsyncadd [#allocation6], %s34
      %s36 = sshll.u32 [#allocation5], 4
      %s37 = int_to_ptr.vmem [resolvable:$true] %s36
      %42 = dma.hbm_to_vmem [thread:$0]  %s3, 12288, %s37, [#allocation6], 192, 192, 12
    $region17: #{_critic_forward_impl.1} parent=1 // pred_fallthru
      _
    // Predicated region
    $region18: #{_critic_forward_impl.1} parent=1 // pred_check
      _
    $region19: #{_critic_forward_impl.1} parent=1 // pred_check_branch
      %44 = sbr.rel (0) target = $region21
    $region20: #{_critic_forward_impl.1} parent=1 // pred_region
      _
    $region21: #{_critic_forward_impl.1} parent=1 // pred_fallthru
      _
    // Predicated region
    $region22: #{_critic_forward_impl.1} parent=1 // pred_check
      _
    $region23: #{_critic_forward_impl.1} parent=1 // pred_check_branch
      %46 = sbr.rel (0) target = $region25
    $region24: #{_critic_forward_impl.1} parent=1 // pred_region
      _
    $region25: #{_critic_forward_impl.1} parent=1 // pred_fallthru
      _
    // Predicated region
    $region26: #{_critic_forward_impl.1} parent=1 // pred_check
      _
    $region27: #{_critic_forward_impl.1} parent=1 // pred_check_branch
      %48 = sbr.rel (0) target = $region29
    $region28: #{_critic_forward_impl.1} parent=1 // pred_region
      _
    $region29: #{_critic_forward_impl.1} parent=1 // pred_fallthru
      _
    // Predicated region
    $region30: #{_critic_forward_impl.1} parent=1 // pred_check
      _
    $region31: #{_critic_forward_impl.1} parent=1 // pred_check_branch
      %50 = sbr.rel (0) target = $region33
    $region32: #{_critic_forward_impl.1} parent=1 // pred_region
      %51 = dma.done [#allocation4], 4096
    $region33: #{_critic_forward_impl.1} parent=1 // pred_fallthru
      _
    // Predicated region
    $region34: #{_critic_forward_impl.1} parent=1 // pred_check
      _
    $region35: #{_critic_forward_impl.1} parent=1 // pred_check_branch
      %53 = sbr.rel (0) target = $region37
    $region36: #{_critic_forward_impl.1} parent=1 // pred_region
      %54 = dma.done [#allocation6], 12288
    $region37: #{_critic_forward_impl.1} parent=1 // pred_fallthru
      _
    %v56 = vld [vmem:[%s0] sm:$0xf]
    %v57 = vld [vmem:[%s0 + $0x4] sm:$0xf]
    %v58 = vld [vmem:[#allocation3] sm:$0xff]
    %v59 = vld [vmem:[#allocation3 + $0x8] sm:$0xff]
    %v60 = vld [vmem:[#allocation3 + $0x10] sm:$0xff]
    %v61 = vld [vmem:[#allocation3 + $0x18] sm:$0xff]
    %v62 = vld [vmem:[#allocation3 + $0x20] sm:$0xff]
    %v63 = vld [vmem:[#allocation3 + $0x28] sm:$0xff]
    %v64 = vld [vmem:[#allocation3 + $0x30] sm:$0xff]
    %v65 = vld [vmem:[#allocation3 + $0x38] sm:$0xff]
    %v66 = vld [vmem:[#allocation3 + $0x40] sm:$0xff]
    %v67 = vld [vmem:[#allocation3 + $0x48] sm:$0xff]
    %v68 = vld [vmem:[#allocation3 + $0x50] sm:$0xff]
    %v69 = vld [vmem:[#allocation3 + $0x58] sm:$0xff]
    %v70 = vld [vmem:[#allocation3 + $0x60] sm:$0xff]
    %v71 = vld [vmem:[#allocation3 + $0x68] sm:$0xff]
    %v72 = vld [vmem:[#allocation3 + $0x70] sm:$0xff]
    %v73 = vld [vmem:[#allocation3 + $0x78] sm:$0xff]
    %v74 = vld [vmem:[#allocation3 + $0x80] sm:$0xff]
    %v75 = vld [vmem:[#allocation3 + $0x88] sm:$0xff]
    %v76 = vld [vmem:[#allocation3 + $0x90] sm:$0xff]
    %v77 = vld [vmem:[#allocation3 + $0x98] sm:$0xff]
    %v78 = vld [vmem:[#allocation3 + $0xa0] sm:$0xff]
    %v79 = vld [vmem:[#allocation3 + $0xa8] sm:$0xff]
    %v80 = vld [vmem:[#allocation3 + $0xb0] sm:$0xff]
    %v81 = vld [vmem:[#allocation3 + $0xb8] sm:$0xff]
    %v82 = vld [vmem:[#allocation3 + $0xc0] sm:$0xff]
    %v83 = vld [vmem:[#allocation3 + $0xc8] sm:$0xff]
    %v84 = vld [vmem:[#allocation3 + $0xd0] sm:$0xff]
    %v85 = vld [vmem:[#allocation3 + $0xd8] sm:$0xff]
    %v86 = vld [vmem:[#allocation3 + $0xe0] sm:$0xff]
    %v87 = vld [vmem:[#allocation3 + $0xe8] sm:$0xff]
    %v88 = vld [vmem:[#allocation3 + $0xf0] sm:$0xff]
    %v89 = vld [vmem:[#allocation3 + $0xf8] sm:$0xff]
    %v90 = vld [vmem:[%s2] sm:$0xf]
    %v92 = vlaneseq
    %v93 = vshrl.u32 %v92, 7
    %v94 = vsub.s32 0, %v93
    %v95 = vrot.slane %v90, %v94
    %v96 = vlaneseq
    %v97 = vshrl.u32 %v96, 7
    %v98 = vsub.s32 1, %v97
    %v99 = vrot.slane %v90, %v98
    %v100 = vlaneseq
    %v101 = vshrl.u32 %v100, 7
    %v102 = vsub.s32 2, %v101
    %v103 = vrot.slane %v90, %v102
    %v104 = vlaneseq
    %v105 = vshrl.u32 %v104, 7
    %v106 = vsub.s32 3, %v105
    %v107 = vrot.slane %v90, %v106
    %v114 = vunpack.c.l.b16 %v56
    %v115 = vunpack.c.l.b16 %v57
    %v116 = vpack.c.b16 %v115, %v114
    %v150 = vunpack.c.l.b16 %v58
    %v151 = vunpack.c.h.b16 %v58
    %v152 = vunpack.c.l.b16 %v59
    %v153 = vunpack.c.h.b16 %v59
    %v154 = vunpack.c.l.b16 %v60
    %v155 = vunpack.c.h.b16 %v60
    %v156 = vunpack.c.l.b16 %v61
    %v157 = vunpack.c.h.b16 %v61
    %v158 = vunpack.c.l.b16 %v62
    %v159 = vunpack.c.h.b16 %v62
    %v160 = vunpack.c.l.b16 %v63
    %v161 = vunpack.c.h.b16 %v63
    %v162 = vunpack.c.l.b16 %v64
    %v163 = vunpack.c.h.b16 %v64
    %v164 = vunpack.c.l.b16 %v65
    %v165 = vunpack.c.h.b16 %v65
    %v166 = vunpack.c.l.b16 %v66
    %v167 = vunpack.c.h.b16 %v66
    %v168 = vunpack.c.l.b16 %v67
    %v169 = vunpack.c.h.b16 %v67
    %v170 = vunpack.c.l.b16 %v68
    %v171 = vunpack.c.h.b16 %v68
    %v172 = vunpack.c.l.b16 %v69
    %v173 = vunpack.c.h.b16 %v69
    %v174 = vunpack.c.l.b16 %v70
    %v175 = vunpack.c.h.b16 %v70
    %v176 = vunpack.c.l.b16 %v71
    %v177 = vunpack.c.h.b16 %v71
    %v178 = vunpack.c.l.b16 %v72
    %v179 = vunpack.c.h.b16 %v72
    %v180 = vunpack.c.l.b16 %v73
    %v181 = vunpack.c.h.b16 %v73
    %v182 = vunpack.c.l.b16 %v74
    %v183 = vunpack.c.h.b16 %v74
    %v184 = vunpack.c.l.b16 %v75
    %v185 = vunpack.c.h.b16 %v75
    %v186 = vunpack.c.l.b16 %v76
    %v187 = vunpack.c.h.b16 %v76
    %v188 = vunpack.c.l.b16 %v77
    %v189 = vunpack.c.h.b16 %v77
    %v190 = vunpack.c.l.b16 %v78
    %v191 = vunpack.c.h.b16 %v78
    %v192 = vunpack.c.l.b16 %v79
    %v193 = vunpack.c.h.b16 %v79
    %v194 = vunpack.c.l.b16 %v80
    %v195 = vunpack.c.h.b16 %v80
    %v196 = vunpack.c.l.b16 %v81
    %v197 = vunpack.c.h.b16 %v81
    %v198 = vunpack.c.l.b16 %v82
    %v199 = vunpack.c.h.b16 %v82
    %v200 = vunpack.c.l.b16 %v83
    %v201 = vunpack.c.h.b16 %v83
    %v202 = vunpack.c.l.b16 %v84
    %v203 = vunpack.c.h.b16 %v84
    %v204 = vunpack.c.l.b16 %v85
    %v205 = vunpack.c.h.b16 %v85
    %v206 = vunpack.c.l.b16 %v86
    %v207 = vunpack.c.h.b16 %v86
    %v208 = vunpack.c.l.b16 %v87
    %v209 = vunpack.c.h.b16 %v87
    %v210 = vunpack.c.l.b16 %v88
    %v211 = vunpack.c.h.b16 %v88
    %v212 = vunpack.c.l.b16 %v89
    %v213 = vunpack.c.h.b16 %v89
    %v214 = vpack.c.b16 %v154, %v150
    %v215 = vpack.c.b16 %v155, %v151
    %v216 = vpack.c.b16 %v156, %v152
    %v217 = vpack.c.b16 %v157, %v153
    %v218 = vpack.c.b16 %v162, %v158
    %v219 = vpack.c.b16 %v163, %v159
    %v220 = vpack.c.b16 %v164, %v160
    %v221 = vpack.c.b16 %v165, %v161
    %v222 = vpack.c.b16 %v170, %v166
    %v223 = vpack.c.b16 %v171, %v167
    %v224 = vpack.c.b16 %v172, %v168
    %v225 = vpack.c.b16 %v173, %v169
    %v226 = vpack.c.b16 %v178, %v174
    %v227 = vpack.c.b16 %v179, %v175
    %v228 = vpack.c.b16 %v180, %v176
    %v229 = vpack.c.b16 %v181, %v177
    %v230 = vpack.c.b16 %v186, %v182
    %v231 = vpack.c.b16 %v187, %v183
    %v232 = vpack.c.b16 %v188, %v184
    %v233 = vpack.c.b16 %v189, %v185
    %v234 = vpack.c.b16 %v194, %v190
    %v235 = vpack.c.b16 %v195, %v191
    %v236 = vpack.c.b16 %v196, %v192
    %v237 = vpack.c.b16 %v197, %v193
    %v238 = vpack.c.b16 %v202, %v198
    %v239 = vpack.c.b16 %v203, %v199
    %v240 = vpack.c.b16 %v204, %v200
    %v241 = vpack.c.b16 %v205, %v201
    %v242 = vpack.c.b16 %v210, %v206
    %v243 = vpack.c.b16 %v211, %v207
    %v244 = vpack.c.b16 %v212, %v208
    %v245 = vpack.c.b16 %v213, %v209
    %278 = vmatprep.subr.bf16.mxu0 %v215
    %279 = vmatpush1.bf16.msra.mxu0 %v214
    %280 = vmatprep.subr.bf16.mxu0 %v219
    %281 = vmatpush1.bf16.msra.mxu0 %v218
    %282 = vmatprep.subr.bf16.mxu0 %v223
    %283 = vmatpush1.bf16.msra.mxu0 %v222
    %284 = vmatprep.subr.bf16.mxu0 %v227
    %285 = vmatpush1.bf16.msra.mxu0 %v226
    %286 = vmatprep.subr.bf16.mxu0 %v231
    %287 = vmatpush1.bf16.msra.mxu0 %v230
    %288 = vmatprep.subr.bf16.mxu0 %v235
    %289 = vmatpush1.bf16.msra.mxu0 %v234
    %290 = vmatprep.subr.bf16.mxu0 %v239
    %291 = vmatpush1.bf16.msra.mxu0 %v238
    %292 = vmatprep.subr.bf16.mxu0 %v243
    %293 = vmatpush1.bf16.msra.mxu0 %v242
    %294 = vmatprep.subr.bf16.mxu0 0
    %295 = vmatpush1.bf16.msra.mxu0 0
    %296 = vmatprep.subr.bf16.mxu0 0
    %297 = vmatpush1.bf16.msra.mxu0 0
    %298 = vmatprep.subr.bf16.mxu0 0
    %299 = vmatpush1.bf16.msra.mxu0 0
    %300 = vmatprep.subr.bf16.mxu0 0
    %301 = vmatpush1.bf16.msra.mxu0 0
    %302 = vmatprep.subr.bf16.mxu0 0
    %303 = vmatpush1.bf16.msra.mxu0 0
    %304 = vmatprep.subr.bf16.mxu0 0
    %305 = vmatpush1.bf16.msra.mxu0 0
    %306 = vmatprep.subr.bf16.mxu0 0
    %307 = vmatpush1.bf16.msra.mxu0 0
    %308 = vmatprep.subr.bf16.mxu0 0
    %309 = vmatpush1.bf16.msra.mxu0 0
    %310 = vmatprep.mubr.bf16.mxu0 0
    %311 = vmatmul.mubr.bf16.gmra.mrb[0].mxu0 %v116
    %v312 = vpop.f32.mrb[0].mxu0
    %v313 = vadd.f32 %v95, %v312
    %v314 = vpop.f32.mrb[0].mxu0
    %v315 = vadd.f32 %v99, %v314
    %v316 = vpop.f32.mrb[0].mxu0
    %v317 = vadd.f32 %v95, %v316
    %v318 = vpop.f32.mrb[0].mxu0
    %v319 = vadd.f32 %v99, %v318
    %320 = vdwg.mxu0
    %321 = vmatprep.subr.bf16.mxu0 %v217
    %322 = vmatpush1.bf16.msra.mxu0 %v216
    %323 = vmatprep.subr.bf16.mxu0 %v221
    %324 = vmatpush1.bf16.msra.mxu0 %v220
    %325 = vmatprep.subr.bf16.mxu0 %v225
    %326 = vmatpush1.bf16.msra.mxu0 %v224
    %327 = vmatprep.subr.bf16.mxu0 %v229
    %328 = vmatpush1.bf16.msra.mxu0 %v228
    %329 = vmatprep.subr.bf16.mxu0 %v233
    %330 = vmatpush1.bf16.msra.mxu0 %v232
    %331 = vmatprep.subr.bf16.mxu0 %v237
    %332 = vmatpush1.bf16.msra.mxu0 %v236
    %333 = vmatprep.subr.bf16.mxu0 %v241
    %334 = vmatpush1.bf16.msra.mxu0 %v240
    %335 = vmatprep.subr.bf16.mxu0 %v245
    %336 = vmatpush1.bf16.msra.mxu0 %v244
    %337 = vmatprep.subr.bf16.mxu0 0
    %338 = vmatpush1.bf16.msra.mxu0 0
    %339 = vmatprep.subr.bf16.mxu0 0
    %340 = vmatpush1.bf16.msra.mxu0 0
    %341 = vmatprep.subr.bf16.mxu0 0
    %342 = vmatpush1.bf16.msra.mxu0 0
    %343 = vmatprep.subr.bf16.mxu0 0
    %344 = vmatpush1.bf16.msra.mxu0 0
    %345 = vmatprep.subr.bf16.mxu0 0
    %346 = vmatpush1.bf16.msra.mxu0 0
    %347 = vmatprep.subr.bf16.mxu0 0
    %348 = vmatpush1.bf16.msra.mxu0 0
    %349 = vmatprep.subr.bf16.mxu0 0
    %350 = vmatpush1.bf16.msra.mxu0 0
    %351 = vmatprep.subr.bf16.mxu0 0
    %352 = vmatpush1.bf16.msra.mxu0 0
    %353 = vmatprep.mubr.bf16.mxu0 0
    %354 = vmatmul.mubr.bf16.gmra.mrb[0].mxu0 %v116
    %v355 = vpop.f32.mrb[0].mxu0
    %v356 = vadd.f32 %v103, %v355
    %v357 = vpop.f32.mrb[0].mxu0
    %v358 = vadd.f32 %v107, %v357
    %v359 = vpop.f32.mrb[0].mxu0
    %v360 = vadd.f32 %v103, %v359
    %v361 = vpop.f32.mrb[0].mxu0
    %v362 = vadd.f32 %v107, %v361
    %363 = vdwg.mxu0
    %v364 = vmax.f32 %v313, 0.0
    %v365 = vmax.f32 %v315, 0.0
    %v366 = vmax.f32 %v356, 0.0
    %v367 = vmax.f32 %v358, 0.0
    %v368 = vmax.f32 %v317, 0.0
    %v369 = vmax.f32 %v319, 0.0
    %v370 = vmax.f32 %v360, 0.0
    %v371 = vmax.f32 %v362, 0.0
    %v372 = vpack.c.bf16 %v368, %v364
    %v373 = vpack.c.bf16 %v369, %v365
    %v374 = vpack.c.bf16 %v370, %v366
    %v375 = vpack.c.bf16 %v371, %v367
    %v376 = vld [vmem:[#allocation5] sm:$0xff]
    %v377 = vld [vmem:[#allocation5 + $0x8] sm:$0xf]
    %v378 = vld [vmem:[#allocation5 + $0xc] sm:$0xff]
    %v379 = vld [vmem:[#allocation5 + $0x14] sm:$0xf]
    %v380 = vld [vmem:[#allocation5 + $0x18] sm:$0xff]
    %v381 = vld [vmem:[#allocation5 + $0x20] sm:$0xf]
    %v382 = vld [vmem:[#allocation5 + $0x24] sm:$0xff]
    %v383 = vld [vmem:[#allocation5 + $0x2c] sm:$0xf]
    %v384 = vld [vmem:[#allocation5 + $0x30] sm:$0xff]
    %v385 = vld [vmem:[#allocation5 + $0x38] sm:$0xf]
    %v386 = vld [vmem:[#allocation5 + $0x3c] sm:$0xff]
    %v387 = vld [vmem:[#allocation5 + $0x44] sm:$0xf]
    %v388 = vld [vmem:[#allocation5 + $0x48] sm:$0xff]
    %v389 = vld [vmem:[#allocation5 + $0x50] sm:$0xf]
    %v390 = vld [vmem:[#allocation5 + $0x54] sm:$0xff]
    %v391 = vld [vmem:[#allocation5 + $0x5c] sm:$0xf]
    %v392 = vld [vmem:[#allocation5 + $0x60] sm:$0xff]
    %v393 = vld [vmem:[#allocation5 + $0x68] sm:$0xf]
    %v394 = vld [vmem:[#allocation5 + $0x6c] sm:$0xff]
    %v395 = vld [vmem:[#allocation5 + $0x74] sm:$0xf]
    %v396 = vld [vmem:[#allocation5 + $0x78] sm:$0xff]
    %v397 = vld [vmem:[#allocation5 + $0x80] sm:$0xf]
    %v398 = vld [vmem:[#allocation5 + $0x84] sm:$0xff]
    %v399 = vld [vmem:[#allocation5 + $0x8c] sm:$0xf]
    %v400 = vld [vmem:[#allocation5 + $0x90] sm:$0xff]
    %v401 = vld [vmem:[#allocation5 + $0x98] sm:$0xf]
    %v402 = vld [vmem:[#allocation5 + $0x9c] sm:$0xff]
    %v403 = vld [vmem:[#allocation5 + $0xa4] sm:$0xf]
    %v404 = vld [vmem:[#allocation5 + $0xa8] sm:$0xff]
    %v405 = vld [vmem:[#allocation5 + $0xb0] sm:$0xf]
    %v406 = vld [vmem:[#allocation5 + $0xb4] sm:$0xff]
    %v407 = vld [vmem:[#allocation5 + $0xbc] sm:$0xf]
    %v408 = vld [vmem:[#allocation5 + $0xc0] sm:$0xff]
    %v409 = vld [vmem:[#allocation5 + $0xc8] sm:$0xf]
    %v410 = vld [vmem:[#allocation5 + $0xcc] sm:$0xff]
    %v411 = vld [vmem:[#allocation5 + $0xd4] sm:$0xf]
    %v412 = vld [vmem:[#allocation5 + $0xd8] sm:$0xff]
    %v413 = vld [vmem:[#allocation5 + $0xe0] sm:$0xf]
    %v414 = vld [vmem:[#allocation5 + $0xe4] sm:$0xff]
    %v415 = vld [vmem:[#allocation5 + $0xec] sm:$0xf]
    %v416 = vld [vmem:[#allocation5 + $0xf0] sm:$0xff]
    %v417 = vld [vmem:[#allocation5 + $0xf8] sm:$0xf]
    %v418 = vld [vmem:[#allocation5 + $0xfc] sm:$0xff]
    %v419 = vld [vmem:[#allocation5 + $0x104] sm:$0xf]
    %v420 = vld [vmem:[#allocation5 + $0x108] sm:$0xff]
    %v421 = vld [vmem:[#allocation5 + $0x110] sm:$0xf]
    %v422 = vld [vmem:[#allocation5 + $0x114] sm:$0xff]
    %v423 = vld [vmem:[#allocation5 + $0x11c] sm:$0xf]
    %v424 = vld [vmem:[#allocation5 + $0x120] sm:$0xff]
    %v425 = vld [vmem:[#allocation5 + $0x128] sm:$0xf]
    %v426 = vld [vmem:[#allocation5 + $0x12c] sm:$0xff]
    %v427 = vld [vmem:[#allocation5 + $0x134] sm:$0xf]
    %v428 = vld [vmem:[#allocation5 + $0x138] sm:$0xff]
    %v429 = vld [vmem:[#allocation5 + $0x140] sm:$0xf]
    %v430 = vld [vmem:[#allocation5 + $0x144] sm:$0xff]
    %v431 = vld [vmem:[#allocation5 + $0x14c] sm:$0xf]
    %v432 = vld [vmem:[#allocation5 + $0x150] sm:$0xff]
    %v433 = vld [vmem:[#allocation5 + $0x158] sm:$0xf]
    %v434 = vld [vmem:[#allocation5 + $0x15c] sm:$0xff]
    %v435 = vld [vmem:[#allocation5 + $0x164] sm:$0xf]
    %v436 = vld [vmem:[#allocation5 + $0x168] sm:$0xff]
    %v437 = vld [vmem:[#allocation5 + $0x170] sm:$0xf]
    %v438 = vld [vmem:[#allocation5 + $0x174] sm:$0xff]
    %v439 = vld [vmem:[#allocation5 + $0x17c] sm:$0xf]
    %v440 = vld [vmem:[#allocation5 + $0x180] sm:$0xff]
    %v441 = vld [vmem:[#allocation5 + $0x188] sm:$0xf]
    %v442 = vld [vmem:[#allocation5 + $0x18c] sm:$0xff]
    %v443 = vld [vmem:[#allocation5 + $0x194] sm:$0xf]
    %v444 = vld [vmem:[#allocation5 + $0x198] sm:$0xff]
    %v445 = vld [vmem:[#allocation5 + $0x1a0] sm:$0xf]
    %v446 = vld [vmem:[#allocation5 + $0x1a4] sm:$0xff]
    %v447 = vld [vmem:[#allocation5 + $0x1ac] sm:$0xf]
    %v448 = vld [vmem:[#allocation5 + $0x1b0] sm:$0xff]
    %v449 = vld [vmem:[#allocation5 + $0x1b8] sm:$0xf]
    %v450 = vld [vmem:[#allocation5 + $0x1bc] sm:$0xff]
    %v451 = vld [vmem:[#allocation5 + $0x1c4] sm:$0xf]
    %v452 = vld [vmem:[#allocation5 + $0x1c8] sm:$0xff]
    %v453 = vld [vmem:[#allocation5 + $0x1d0] sm:$0xf]
    %v454 = vld [vmem:[#allocation5 + $0x1d4] sm:$0xff]
    %v455 = vld [vmem:[#allocation5 + $0x1dc] sm:$0xf]
    %v456 = vld [vmem:[#allocation5 + $0x1e0] sm:$0xff]
    %v457 = vld [vmem:[#allocation5 + $0x1e8] sm:$0xf]
    %v458 = vld [vmem:[#allocation5 + $0x1ec] sm:$0xff]
    %v459 = vld [vmem:[#allocation5 + $0x1f4] sm:$0xf]
    %v460 = vld [vmem:[#allocation5 + $0x1f8] sm:$0xff]
    %v461 = vld [vmem:[#allocation5 + $0x200] sm:$0xf]
    %v462 = vld [vmem:[#allocation5 + $0x204] sm:$0xff]
    %v463 = vld [vmem:[#allocation5 + $0x20c] sm:$0xf]
    %v464 = vld [vmem:[#allocation5 + $0x210] sm:$0xff]
    %v465 = vld [vmem:[#allocation5 + $0x218] sm:$0xf]
    %v466 = vld [vmem:[#allocation5 + $0x21c] sm:$0xff]
    %v467 = vld [vmem:[#allocation5 + $0x224] sm:$0xf]
    %v468 = vld [vmem:[#allocation5 + $0x228] sm:$0xff]
    %v469 = vld [vmem:[#allocation5 + $0x230] sm:$0xf]
    %v470 = vld [vmem:[#allocation5 + $0x234] sm:$0xff]
    %v471 = vld [vmem:[#allocation5 + $0x23c] sm:$0xf]
    %v472 = vld [vmem:[#allocation5 + $0x240] sm:$0xff]
    %v473 = vld [vmem:[#allocation5 + $0x248] sm:$0xf]
    %v474 = vld [vmem:[#allocation5 + $0x24c] sm:$0xff]
    %v475 = vld [vmem:[#allocation5 + $0x254] sm:$0xf]
    %v476 = vld [vmem:[#allocation5 + $0x258] sm:$0xff]
    %v477 = vld [vmem:[#allocation5 + $0x260] sm:$0xf]
    %v478 = vld [vmem:[#allocation5 + $0x264] sm:$0xff]
    %v479 = vld [vmem:[#allocation5 + $0x26c] sm:$0xf]
    %v480 = vld [vmem:[#allocation5 + $0x270] sm:$0xff]
    %v481 = vld [vmem:[#allocation5 + $0x278] sm:$0xf]
    %v482 = vld [vmem:[#allocation5 + $0x27c] sm:$0xff]
    %v483 = vld [vmem:[#allocation5 + $0x284] sm:$0xf]
    %v484 = vld [vmem:[#allocation5 + $0x288] sm:$0xff]
    %v485 = vld [vmem:[#allocation5 + $0x290] sm:$0xf]
    %v486 = vld [vmem:[#allocation5 + $0x294] sm:$0xff]
    %v487 = vld [vmem:[#allocation5 + $0x29c] sm:$0xf]
    %v488 = vld [vmem:[#allocation5 + $0x2a0] sm:$0xff]
    %v489 = vld [vmem:[#allocation5 + $0x2a8] sm:$0xf]
    %v490 = vld [vmem:[#allocation5 + $0x2ac] sm:$0xff]
    %v491 = vld [vmem:[#allocation5 + $0x2b4] sm:$0xf]
    %v492 = vld [vmem:[#allocation5 + $0x2b8] sm:$0xff]
    %v493 = vld [vmem:[#allocation5 + $0x2c0] sm:$0xf]
    %v494 = vld [vmem:[#allocation5 + $0x2c4] sm:$0xff]
    %v495 = vld [vmem:[#allocation5 + $0x2cc] sm:$0xf]
    %v496 = vld [vmem:[#allocation5 + $0x2d0] sm:$0xff]
    %v497 = vld [vmem:[#allocation5 + $0x2d8] sm:$0xf]
    %v498 = vld [vmem:[#allocation5 + $0x2dc] sm:$0xff]
    %v499 = vld [vmem:[#allocation5 + $0x2e4] sm:$0xf]
    %v500 = vld [vmem:[#allocation5 + $0x2e8] sm:$0xff]
    %v501 = vld [vmem:[#allocation5 + $0x2f0] sm:$0xf]
    %v502 = vld [vmem:[#allocation5 + $0x2f4] sm:$0xff]
    %v503 = vld [vmem:[#allocation5 + $0x2fc] sm:$0xf]
    %v504 = vld [vmem:[%s4] sm:$0x7]
    %v506 = vlaneseq
    %v507 = vshrl.u32 %v506, 7
    %v508 = vsub.s32 0, %v507
    %v509 = vrot.slane %v504, %v508
    %v510 = vlaneseq
    %v511 = vshrl.u32 %v510, 7
    %v512 = vsub.s32 1, %v511
    %v513 = vrot.slane %v504, %v512
    %v514 = vlaneseq
    %v515 = vshrl.u32 %v514, 7
    %v516 = vsub.s32 2, %v515
    %v517 = vrot.slane %v504, %v516
    %v649 = vunpack.c.l.b16 %v376
    %v650 = vunpack.c.h.b16 %v376
    %v651 = vunpack.c.l.b16 %v377
    %v652 = vunpack.c.l.b16 %v378
    %v653 = vunpack.c.h.b16 %v378
    %v654 = vunpack.c.l.b16 %v379
    %v655 = vunpack.c.l.b16 %v380
    %v656 = vunpack.c.h.b16 %v380
    %v657 = vunpack.c.l.b16 %v381
    %v658 = vunpack.c.l.b16 %v382
    %v659 = vunpack.c.h.b16 %v382
    %v660 = vunpack.c.l.b16 %v383
    %v661 = vunpack.c.l.b16 %v384
    %v662 = vunpack.c.h.b16 %v384
    %v663 = vunpack.c.l.b16 %v385
    %v664 = vunpack.c.l.b16 %v386
    %v665 = vunpack.c.h.b16 %v386
    %v666 = vunpack.c.l.b16 %v387
    %v667 = vunpack.c.l.b16 %v388
    %v668 = vunpack.c.h.b16 %v388
    %v669 = vunpack.c.l.b16 %v389
    %v670 = vunpack.c.l.b16 %v390
    %v671 = vunpack.c.h.b16 %v390
    %v672 = vunpack.c.l.b16 %v391
    %v673 = vunpack.c.l.b16 %v392
    %v674 = vunpack.c.h.b16 %v392
    %v675 = vunpack.c.l.b16 %v393
    %v676 = vunpack.c.l.b16 %v394
    %v677 = vunpack.c.h.b16 %v394
    %v678 = vunpack.c.l.b16 %v395
    %v679 = vunpack.c.l.b16 %v396
    %v680 = vunpack.c.h.b16 %v396
    %v681 = vunpack.c.l.b16 %v397
    %v682 = vunpack.c.l.b16 %v398
    %v683 = vunpack.c.h.b16 %v398
    %v684 = vunpack.c.l.b16 %v399
    %v685 = vunpack.c.l.b16 %v400
    %v686 = vunpack.c.h.b16 %v400
    %v687 = vunpack.c.l.b16 %v401
    %v688 = vunpack.c.l.b16 %v402
    %v689 = vunpack.c.h.b16 %v402
    %v690 = vunpack.c.l.b16 %v403
    %v691 = vunpack.c.l.b16 %v404
    %v692 = vunpack.c.h.b16 %v404
    %v693 = vunpack.c.l.b16 %v405
    %v694 = vunpack.c.l.b16 %v406
    %v695 = vunpack.c.h.b16 %v406
    %v696 = vunpack.c.l.b16 %v407
    %v697 = vunpack.c.l.b16 %v408
    %v698 = vunpack.c.h.b16 %v408
    %v699 = vunpack.c.l.b16 %v409
    %v700 = vunpack.c.l.b16 %v410
    %v701 = vunpack.c.h.b16 %v410
    %v702 = vunpack.c.l.b16 %v411
    %v703 = vunpack.c.l.b16 %v412
    %v704 = vunpack.c.h.b16 %v412
    %v705 = vunpack.c.l.b16 %v413
    %v706 = vunpack.c.l.b16 %v414
    %v707 = vunpack.c.h.b16 %v414
    %v708 = vunpack.c.l.b16 %v415
    %v709 = vunpack.c.l.b16 %v416
    %v710 = vunpack.c.h.b16 %v416
    %v711 = vunpack.c.l.b16 %v417
    %v712 = vunpack.c.l.b16 %v418
    %v713 = vunpack.c.h.b16 %v418
    %v714 = vunpack.c.l.b16 %v419
    %v715 = vunpack.c.l.b16 %v420
    %v716 = vunpack.c.h.b16 %v420
    %v717 = vunpack.c.l.b16 %v421
    %v718 = vunpack.c.l.b16 %v422
    %v719 = vunpack.c.h.b16 %v422
    %v720 = vunpack.c.l.b16 %v423
    %v721 = vunpack.c.l.b16 %v424
    %v722 = vunpack.c.h.b16 %v424
    %v723 = vunpack.c.l.b16 %v425
    %v724 = vunpack.c.l.b16 %v426
    %v725 = vunpack.c.h.b16 %v426
    %v726 = vunpack.c.l.b16 %v427
    %v727 = vunpack.c.l.b16 %v428
    %v728 = vunpack.c.h.b16 %v428
    %v729 = vunpack.c.l.b16 %v429
    %v730 = vunpack.c.l.b16 %v430
    %v731 = vunpack.c.h.b16 %v430
    %v732 = vunpack.c.l.b16 %v431
    %v733 = vunpack.c.l.b16 %v432
    %v734 = vunpack.c.h.b16 %v432
    %v735 = vunpack.c.l.b16 %v433
    %v736 = vunpack.c.l.b16 %v434
    %v737 = vunpack.c.h.b16 %v434
    %v738 = vunpack.c.l.b16 %v435
    %v739 = vunpack.c.l.b16 %v436
    %v740 = vunpack.c.h.b16 %v436
    %v741 = vunpack.c.l.b16 %v437
    %v742 = vunpack.c.l.b16 %v438
    %v743 = vunpack.c.h.b16 %v438
    %v744 = vunpack.c.l.b16 %v439
    %v745 = vunpack.c.l.b16 %v440
    %v746 = vunpack.c.h.b16 %v440
    %v747 = vunpack.c.l.b16 %v441
    %v748 = vunpack.c.l.b16 %v442
    %v749 = vunpack.c.h.b16 %v442
    %v750 = vunpack.c.l.b16 %v443
    %v751 = vunpack.c.l.b16 %v444
    %v752 = vunpack.c.h.b16 %v444
    %v753 = vunpack.c.l.b16 %v445
    %v754 = vunpack.c.l.b16 %v446
    %v755 = vunpack.c.h.b16 %v446
    %v756 = vunpack.c.l.b16 %v447
    %v757 = vunpack.c.l.b16 %v448
    %v758 = vunpack.c.h.b16 %v448
    %v759 = vunpack.c.l.b16 %v449
    %v760 = vunpack.c.l.b16 %v450
    %v761 = vunpack.c.h.b16 %v450
    %v762 = vunpack.c.l.b16 %v451
    %v763 = vunpack.c.l.b16 %v452
    %v764 = vunpack.c.h.b16 %v452
    %v765 = vunpack.c.l.b16 %v453
    %v766 = vunpack.c.l.b16 %v454
    %v767 = vunpack.c.h.b16 %v454
    %v768 = vunpack.c.l.b16 %v455
    %v769 = vunpack.c.l.b16 %v456
    %v770 = vunpack.c.h.b16 %v456
    %v771 = vunpack.c.l.b16 %v457
    %v772 = vunpack.c.l.b16 %v458
    %v773 = vunpack.c.h.b16 %v458
    %v774 = vunpack.c.l.b16 %v459
    %v775 = vunpack.c.l.b16 %v460
    %v776 = vunpack.c.h.b16 %v460
    %v777 = vunpack.c.l.b16 %v461
    %v778 = vunpack.c.l.b16 %v462
    %v779 = vunpack.c.h.b16 %v462
    %v780 = vunpack.c.l.b16 %v463
    %v781 = vunpack.c.l.b16 %v464
    %v782 = vunpack.c.h.b16 %v464
    %v783 = vunpack.c.l.b16 %v465
    %v784 = vunpack.c.l.b16 %v466
    %v785 = vunpack.c.h.b16 %v466
    %v786 = vunpack.c.l.b16 %v467
    %v787 = vunpack.c.l.b16 %v468
    %v788 = vunpack.c.h.b16 %v468
    %v789 = vunpack.c.l.b16 %v469
    %v790 = vunpack.c.l.b16 %v470
    %v791 = vunpack.c.h.b16 %v470
    %v792 = vunpack.c.l.b16 %v471
    %v793 = vunpack.c.l.b16 %v472
    %v794 = vunpack.c.h.b16 %v472
    %v795 = vunpack.c.l.b16 %v473
    %v796 = vunpack.c.l.b16 %v474
    %v797 = vunpack.c.h.b16 %v474
    %v798 = vunpack.c.l.b16 %v475
    %v799 = vunpack.c.l.b16 %v476
    %v800 = vunpack.c.h.b16 %v476
    %v801 = vunpack.c.l.b16 %v477
    %v802 = vunpack.c.l.b16 %v478
    %v803 = vunpack.c.h.b16 %v478
    %v804 = vunpack.c.l.b16 %v479
    %v805 = vunpack.c.l.b16 %v480
    %v806 = vunpack.c.h.b16 %v480
    %v807 = vunpack.c.l.b16 %v481
    %v808 = vunpack.c.l.b16 %v482
    %v809 = vunpack.c.h.b16 %v482
    %v810 = vunpack.c.l.b16 %v483
    %v811 = vunpack.c.l.b16 %v484
    %v812 = vunpack.c.h.b16 %v484
    %v813 = vunpack.c.l.b16 %v485
    %v814 = vunpack.c.l.b16 %v486
    %v815 = vunpack.c.h.b16 %v486
    %v816 = vunpack.c.l.b16 %v487
    %v817 = vunpack.c.l.b16 %v488
    %v818 = vunpack.c.h.b16 %v488
    %v819 = vunpack.c.l.b16 %v489
    %v820 = vunpack.c.l.b16 %v490
    %v821 = vunpack.c.h.b16 %v490
    %v822 = vunpack.c.l.b16 %v491
    %v823 = vunpack.c.l.b16 %v492
    %v824 = vunpack.c.h.b16 %v492
    %v825 = vunpack.c.l.b16 %v493
    %v826 = vunpack.c.l.b16 %v494
    %v827 = vunpack.c.h.b16 %v494
    %v828 = vunpack.c.l.b16 %v495
    %v829 = vunpack.c.l.b16 %v496
    %v830 = vunpack.c.h.b16 %v496
    %v831 = vunpack.c.l.b16 %v497
    %v832 = vunpack.c.l.b16 %v498
    %v833 = vunpack.c.h.b16 %v498
    %v834 = vunpack.c.l.b16 %v499
    %v835 = vunpack.c.l.b16 %v500
    %v836 = vunpack.c.h.b16 %v500
    %v837 = vunpack.c.l.b16 %v501
    %v838 = vunpack.c.l.b16 %v502
    %v839 = vunpack.c.h.b16 %v502
    %v840 = vunpack.c.l.b16 %v503
    %v841 = vpack.c.b16 %v652, %v649
    %v842 = vpack.c.b16 %v653, %v650
    %v843 = vpack.c.b16 %v654, %v651
    %v844 = vpack.c.b16 %v658, %v655
    %v845 = vpack.c.b16 %v659, %v656
    %v846 = vpack.c.b16 %v660, %v657
    %v847 = vpack.c.b16 %v664, %v661
    %v848 = vpack.c.b16 %v665, %v662
    %v849 = vpack.c.b16 %v666, %v663
    %v850 = vpack.c.b16 %v670, %v667
    %v851 = vpack.c.b16 %v671, %v668
    %v852 = vpack.c.b16 %v672, %v669
    %v853 = vpack.c.b16 %v676, %v673
    %v854 = vpack.c.b16 %v677, %v674
    %v855 = vpack.c.b16 %v678, %v675
    %v856 = vpack.c.b16 %v682, %v679
    %v857 = vpack.c.b16 %v683, %v680
    %v858 = vpack.c.b16 %v684, %v681
    %v859 = vpack.c.b16 %v688, %v685
    %v860 = vpack.c.b16 %v689, %v686
    %v861 = vpack.c.b16 %v690, %v687
    %v862 = vpack.c.b16 %v694, %v691
    %v863 = vpack.c.b16 %v695, %v692
    %v864 = vpack.c.b16 %v696, %v693
    %v865 = vpack.c.b16 %v700, %v697
    %v866 = vpack.c.b16 %v701, %v698
    %v867 = vpack.c.b16 %v702, %v699
    %v868 = vpack.c.b16 %v706, %v703
    %v869 = vpack.c.b16 %v707, %v704
    %v870 = vpack.c.b16 %v708, %v705
    %v871 = vpack.c.b16 %v712, %v709
    %v872 = vpack.c.b16 %v713, %v710
    %v873 = vpack.c.b16 %v714, %v711
    %v874 = vpack.c.b16 %v718, %v715
    %v875 = vpack.c.b16 %v719, %v716
    %v876 = vpack.c.b16 %v720, %v717
    %v877 = vpack.c.b16 %v724, %v721
    %v878 = vpack.c.b16 %v725, %v722
    %v879 = vpack.c.b16 %v726, %v723
    %v880 = vpack.c.b16 %v730, %v727
    %v881 = vpack.c.b16 %v731, %v728
    %v882 = vpack.c.b16 %v732, %v729
    %v883 = vpack.c.b16 %v736, %v733
    %v884 = vpack.c.b16 %v737, %v734
    %v885 = vpack.c.b16 %v738, %v735
    %v886 = vpack.c.b16 %v742, %v739
    %v887 = vpack.c.b16 %v743, %v740
    %v888 = vpack.c.b16 %v744, %v741
    %v889 = vpack.c.b16 %v748, %v745
    %v890 = vpack.c.b16 %v749, %v746
    %v891 = vpack.c.b16 %v750, %v747
    %v892 = vpack.c.b16 %v754, %v751
    %v893 = vpack.c.b16 %v755, %v752
    %v894 = vpack.c.b16 %v756, %v753
    %v895 = vpack.c.b16 %v760, %v757
    %v896 = vpack.c.b16 %v761, %v758
    %v897 = vpack.c.b16 %v762, %v759
    %v898 = vpack.c.b16 %v766, %v763
    %v899 = vpack.c.b16 %v767, %v764
    %v900 = vpack.c.b16 %v768, %v765
    %v901 = vpack.c.b16 %v772, %v769
    %v902 = vpack.c.b16 %v773, %v770
    %v903 = vpack.c.b16 %v774, %v771
    %v904 = vpack.c.b16 %v778, %v775
    %v905 = vpack.c.b16 %v779, %v776
    %v906 = vpack.c.b16 %v780, %v777
    %v907 = vpack.c.b16 %v784, %v781
    %v908 = vpack.c.b16 %v785, %v782
    %v909 = vpack.c.b16 %v786, %v783
    %v910 = vpack.c.b16 %v790, %v787
    %v911 = vpack.c.b16 %v791, %v788
    %v912 = vpack.c.b16 %v792, %v789
    %v913 = vpack.c.b16 %v796, %v793
    %v914 = vpack.c.b16 %v797, %v794
    %v915 = vpack.c.b16 %v798, %v795
    %v916 = vpack.c.b16 %v802, %v799
    %v917 = vpack.c.b16 %v803, %v800
    %v918 = vpack.c.b16 %v804, %v801
    %v919 = vpack.c.b16 %v808, %v805
    %v920 = vpack.c.b16 %v809, %v806
    %v921 = vpack.c.b16 %v810, %v807
    %v922 = vpack.c.b16 %v814, %v811
    %v923 = vpack.c.b16 %v815, %v812
    %v924 = vpack.c.b16 %v816, %v813
    %v925 = vpack.c.b16 %v820, %v817
    %v926 = vpack.c.b16 %v821, %v818
    %v927 = vpack.c.b16 %v822, %v819
    %v928 = vpack.c.b16 %v826, %v823
    %v929 = vpack.c.b16 %v827, %v824
    %v930 = vpack.c.b16 %v828, %v825
    %v931 = vpack.c.b16 %v832, %v829
    %v932 = vpack.c.b16 %v833, %v830
    %v933 = vpack.c.b16 %v834, %v831
    %v934 = vpack.c.b16 %v838, %v835
    %v935 = vpack.c.b16 %v839, %v836
    %v936 = vpack.c.b16 %v840, %v837
    %1033 = vmatprep.subr.bf16.mxu0 %v842
    %1034 = vmatpush1.bf16.msra.mxu0 %v841
    %1035 = vmatprep.subr.bf16.mxu0 %v845
    %1036 = vmatpush1.bf16.msra.mxu0 %v844
    %1037 = vmatprep.subr.bf16.mxu0 %v848
    %1038 = vmatpush1.bf16.msra.mxu0 %v847
    %1039 = vmatprep.subr.bf16.mxu0 %v851
    %1040 = vmatpush1.bf16.msra.mxu0 %v850
    %1041 = vmatprep.subr.bf16.mxu0 %v854
    %1042 = vmatpush1.bf16.msra.mxu0 %v853
    %1043 = vmatprep.subr.bf16.mxu0 %v857
    %1044 = vmatpush1.bf16.msra.mxu0 %v856
    %1045 = vmatprep.subr.bf16.mxu0 %v860
    %1046 = vmatpush1.bf16.msra.mxu0 %v859
    %1047 = vmatprep.subr.bf16.mxu0 %v863
    %1048 = vmatpush1.bf16.msra.mxu0 %v862
    %1049 = vmatprep.subr.bf16.mxu0 %v866
    %1050 = vmatpush1.bf16.msra.mxu0 %v865
    %1051 = vmatprep.subr.bf16.mxu0 %v869
    %1052 = vmatpush1.bf16.msra.mxu0 %v868
    %1053 = vmatprep.subr.bf16.mxu0 %v872
    %1054 = vmatpush1.bf16.msra.mxu0 %v871
    %1055 = vmatprep.subr.bf16.mxu0 %v875
    %1056 = vmatpush1.bf16.msra.mxu0 %v874
    %1057 = vmatprep.subr.bf16.mxu0 %v878
    %1058 = vmatpush1.bf16.msra.mxu0 %v877
    %1059 = vmatprep.subr.bf16.mxu0 %v881
    %1060 = vmatpush1.bf16.msra.mxu0 %v880
    %1061 = vmatprep.subr.bf16.mxu0 %v884
    %1062 = vmatpush1.bf16.msra.mxu0 %v883
    %1063 = vmatprep.subr.bf16.mxu0 %v887
    %1064 = vmatpush1.bf16.msra.mxu0 %v886
    %1065 = vmatprep.mubr.bf16.mxu0 %v373
    %1066 = vmatmul.mubr.bf16.gmra.mrb[0].mxu0 %v372
    %v1067 = vpop.f32.mrb[0].mxu0
    %v1068 = vadd.f32 %v509, %v1067
    %v1069 = vpop.f32.mrb[0].mxu0
    %v1070 = vadd.f32 %v513, %v1069
    %v1071 = vpop.f32.mrb[0].mxu0
    %v1072 = vadd.f32 %v509, %v1071
    %v1073 = vpop.f32.mrb[0].mxu0
    %v1074 = vadd.f32 %v513, %v1073
    %1075 = vdwg.mxu0
    %1076 = vmatprep.subr.bf16.mxu0 %v890
    %1077 = vmatpush1.bf16.msra.mxu0 %v889
    %1078 = vmatprep.subr.bf16.mxu0 %v893
    %1079 = vmatpush1.bf16.msra.mxu0 %v892
    %1080 = vmatprep.subr.bf16.mxu0 %v896
    %1081 = vmatpush1.bf16.msra.mxu0 %v895
    %1082 = vmatprep.subr.bf16.mxu0 %v899
    %1083 = vmatpush1.bf16.msra.mxu0 %v898
    %1084 = vmatprep.subr.bf16.mxu0 %v902
    %1085 = vmatpush1.bf16.msra.mxu0 %v901
    %1086 = vmatprep.subr.bf16.mxu0 %v905
    %1087 = vmatpush1.bf16.msra.mxu0 %v904
    %1088 = vmatprep.subr.bf16.mxu0 %v908
    %1089 = vmatpush1.bf16.msra.mxu0 %v907
    %1090 = vmatprep.subr.bf16.mxu0 %v911
    %1091 = vmatpush1.bf16.msra.mxu0 %v910
    %1092 = vmatprep.subr.bf16.mxu0 %v914
    %1093 = vmatpush1.bf16.msra.mxu0 %v913
    %1094 = vmatprep.subr.bf16.mxu0 %v917
    %1095 = vmatpush1.bf16.msra.mxu0 %v916
    %1096 = vmatprep.subr.bf16.mxu0 %v920
    %1097 = vmatpush1.bf16.msra.mxu0 %v919
    %1098 = vmatprep.subr.bf16.mxu0 %v923
    %1099 = vmatpush1.bf16.msra.mxu0 %v922
    %1100 = vmatprep.subr.bf16.mxu0 %v926
    %1101 = vmatpush1.bf16.msra.mxu0 %v925
    %1102 = vmatprep.subr.bf16.mxu0 %v929
    %1103 = vmatpush1.bf16.msra.mxu0 %v928
    %1104 = vmatprep.subr.bf16.mxu0 %v932
    %1105 = vmatpush1.bf16.msra.mxu0 %v931
    %1106 = vmatprep.subr.bf16.mxu0 %v935
    %1107 = vmatpush1.bf16.msra.mxu0 %v934
    %1108 = vmatprep.mubr.bf16.mxu0 %v375
    %1109 = vmatmul.mubr.bf16.gmra.mrb[0].mxu0 %v374
    %v1110 = vpop.f32.mrb[0].mxu0
    %v1111 = vadd.f32 %v1068, %v1110
    %v1112 = vpop.f32.mrb[0].mxu0
    %v1113 = vadd.f32 %v1070, %v1112
    %v1114 = vpop.f32.mrb[0].mxu0
    %v1115 = vadd.f32 %v1072, %v1114
    %v1116 = vpop.f32.mrb[0].mxu0
    %v1117 = vadd.f32 %v1074, %v1116
    %1118 = vdwg.mxu0
    %1119 = vmatprep.subr.bf16.mxu0 0
    %1120 = vmatpush1.bf16.msra.mxu0 %v843
    %1121 = vmatprep.subr.bf16.mxu0 0
    %1122 = vmatpush1.bf16.msra.mxu0 %v846
    %1123 = vmatprep.subr.bf16.mxu0 0
    %1124 = vmatpush1.bf16.msra.mxu0 %v849
    %1125 = vmatprep.subr.bf16.mxu0 0
    %1126 = vmatpush1.bf16.msra.mxu0 %v852
    %1127 = vmatprep.subr.bf16.mxu0 0
    %1128 = vmatpush1.bf16.msra.mxu0 %v855
    %1129 = vmatprep.subr.bf16.mxu0 0
    %1130 = vmatpush1.bf16.msra.mxu0 %v858
    %1131 = vmatprep.subr.bf16.mxu0 0
    %1132 = vmatpush1.bf16.msra.mxu0 %v861
    %1133 = vmatprep.subr.bf16.mxu0 0
    %1134 = vmatpush1.bf16.msra.mxu0 %v864
    %1135 = vmatprep.subr.bf16.mxu0 0
    %1136 = vmatpush1.bf16.msra.mxu0 %v867
    %1137 = vmatprep.subr.bf16.mxu0 0
    %1138 = vmatpush1.bf16.msra.mxu0 %v870
    %1139 = vmatprep.subr.bf16.mxu0 0
    %1140 = vmatpush1.bf16.msra.mxu0 %v873
    %1141 = vmatprep.subr.bf16.mxu0 0
    %1142 = vmatpush1.bf16.msra.mxu0 %v876
    %1143 = vmatprep.subr.bf16.mxu0 0
    %1144 = vmatpush1.bf16.msra.mxu0 %v879
    %1145 = vmatprep.subr.bf16.mxu0 0
    %1146 = vmatpush1.bf16.msra.mxu0 %v882
    %1147 = vmatprep.subr.bf16.mxu0 0
    %1148 = vmatpush1.bf16.msra.mxu0 %v885
    %1149 = vmatprep.subr.bf16.mxu0 0
    %1150 = vmatpush1.bf16.msra.mxu0 %v888
    %1151 = vmatprep.mubr.bf16.mxu0 %v373
    %1152 = vmatmul.mubr.bf16.gmra.mrb[0].mxu0 %v372
    %v1153 = vpop.f32.mrb[0].mxu0
    %v1154 = vadd.f32 %v517, %v1153
    %v1155 = vpop.f32.mrb[0].mxu0
    %v1156 = vpop.f32.mrb[0].mxu0
    %v1157 = vadd.f32 %v517, %v1156
    %v1158 = vpop.f32.mrb[0].mxu0
    %1159 = vdwg.mxu0
    %1160 = vmatprep.subr.bf16.mxu0 0
    %1161 = vmatpush1.bf16.msra.mxu0 %v891
    %1162 = vmatprep.subr.bf16.mxu0 0
    %1163 = vmatpush1.bf16.msra.mxu0 %v894
    %1164 = vmatprep.subr.bf16.mxu0 0
    %1165 = vmatpush1.bf16.msra.mxu0 %v897
    %1166 = vmatprep.subr.bf16.mxu0 0
    %1167 = vmatpush1.bf16.msra.mxu0 %v900
    %1168 = vmatprep.subr.bf16.mxu0 0
    %1169 = vmatpush1.bf16.msra.mxu0 %v903
    %1170 = vmatprep.subr.bf16.mxu0 0
    %1171 = vmatpush1.bf16.msra.mxu0 %v906
    %1172 = vmatprep.subr.bf16.mxu0 0
    %1173 = vmatpush1.bf16.msra.mxu0 %v909
    %1174 = vmatprep.subr.bf16.mxu0 0
    %1175 = vmatpush1.bf16.msra.mxu0 %v912
    %1176 = vmatprep.subr.bf16.mxu0 0
    %1177 = vmatpush1.bf16.msra.mxu0 %v915
    %1178 = vmatprep.subr.bf16.mxu0 0
    %1179 = vmatpush1.bf16.msra.mxu0 %v918
    %1180 = vmatprep.subr.bf16.mxu0 0
    %1181 = vmatpush1.bf16.msra.mxu0 %v921
    %1182 = vmatprep.subr.bf16.mxu0 0
    %1183 = vmatpush1.bf16.msra.mxu0 %v924
    %1184 = vmatprep.subr.bf16.mxu0 0
    %1185 = vmatpush1.bf16.msra.mxu0 %v927
    %1186 = vmatprep.subr.bf16.mxu0 0
    %1187 = vmatpush1.bf16.msra.mxu0 %v930
    %1188 = vmatprep.subr.bf16.mxu0 0
    %1189 = vmatpush1.bf16.msra.mxu0 %v933
    %1190 = vmatprep.subr.bf16.mxu0 0
    %1191 = vmatpush1.bf16.msra.mxu0 %v936
    %1192 = vmatprep.mubr.bf16.mxu0 %v375
    %1193 = vmatmul.mubr.bf16.gmra.mrb[0].mxu0 %v374
    %v1194 = vpop.f32.mrb[0].mxu0
    %v1195 = vadd.f32 %v1154, %v1194
    %v1196 = vpop.f32.mrb[0].mxu0
    %v1197 = vpop.f32.mrb[0].mxu0
    %v1198 = vadd.f32 %v1157, %v1197
    %v1199 = vpop.f32.mrb[0].mxu0
    %1200 = vdwg.mxu0
    %v1201 = vmax.f32 %v1111, 0.0
    %v1202 = vmax.f32 %v1113, 0.0
    %v1203 = vmax.f32 %v1195, 0.0
    %v1204 = vmax.f32 %v1115, 0.0
    %v1205 = vmax.f32 %v1117, 0.0
    %v1206 = vmax.f32 %v1198, 0.0
    %v1207 = vld [vmem:[%s5] sm:$0x7]
    %v1209 = vlaneseq
    %v1210 = vshrl.u32 %v1209, 7
    %v1211 = vsub.s32 0, %v1210
    %v1212 = vrot.slane %v1207, %v1211
    %v1213 = vlaneseq
    %v1214 = vshrl.u32 %v1213, 7
    %v1215 = vsub.s32 1, %v1214
    %v1216 = vrot.slane %v1207, %v1215
    %v1217 = vlaneseq
    %v1218 = vshrl.u32 %v1217, 7
    %v1219 = vsub.s32 2, %v1218
    %v1220 = vrot.slane %v1207, %v1219
    %v1224 = vmul.f32 %v1201, %v1212
    %v1225 = vmul.f32 %v1202, %v1216
    %v1226 = vmul.f32 %v1203, %v1220
    %v1227 = vmul.f32 %v1204, %v1212
    %v1228 = vmul.f32 %v1205, %v1216
    %v1229 = vmul.f32 %v1206, %v1220
    %v1230 = vadd.f32 %v1224, %v1225
    %v1231 = vadd.f32 %v1230, %v1226
    %1232 = vadd.xlane.f32.xlu0 %v1231
    %v1233 = vpop.xlane.xlu0 %1232
    %v1234 = vadd.f32 %v1227, %v1228
    %v1235 = vadd.f32 %v1234, %v1229
    %1236 = vadd.xlane.f32.xlu0 %v1235
    %v1237 = vpop.xlane.xlu0 %1236
    %s1238 = sld [smem:[#allocation2]]
    %v1239 = vstv %s1238
    %v1240 = vadd.f32 %v1233, %v1239
    %v1241 = vadd.f32 %v1237, %v1239
    %vm1242 = vcmask 7168
    %1243 = vst.msk [vmem:[%s7] sm:$0xff] %vm1242, %v1240
    %1244 = vst.msk [vmem:[%s7 + $0x8] sm:$0xff] %vm1242, %v1241
    // Predicated region
    $region38: #{_critic_forward_impl.1} parent=1 // pred_check
      _
    $region39: #{_critic_forward_impl.1} parent=1 // pred_check_branch
      %1246 = sbr.rel (0) target = $region41
    $region40: #{_critic_forward_impl.1} parent=1 // pred_region
      _
    $region41: #{_critic_forward_impl.1} parent=1 // pred_fallthru
      _
    // Predicated region
    $region42: #{_critic_forward_impl.1} parent=1 // pred_check
      _
    $region43: #{_critic_forward_impl.1} parent=1 // pred_check_branch
      %1248 = sbr.rel (0) target = $region45
    $region44: #{_critic_forward_impl.1} parent=1 // pred_region
      _
    $region45: #{_critic_forward_impl.1} parent=1 // pred_fallthru
      _
    %1249 = vsyncpa [#allocation4], 1
    %1250 = vsyncpa [#allocation6], 1

</llo_original>
